<compile_context>
chip_gen: v6e
topology: v6e:2x2x1
jax: 0.10.0
libtpu: 0.0.40
codegen_flags: <defaults>
</compile_context>

<pallas_src>
import jax
import jax.numpy as jnp
import numpy as np
from jax.experimental import pallas as pl
from jax.experimental.pallas import tpu as pltpu


def _round_up(x, m):
    return ((x + m - 1) // m) * m


# ------------------------------- kernel --------------------------------------
def make_hnn_kernel(dim, width, fwidth):
    two_d = 2 * dim

    def kernel(in_ref, w1_ref, w2_ref, w2t_ref, aphi_ref, fw2_ref, c_ref, out_ref):
        # --- unpack the per-tile input slab with static ref slices -----------
        x0 = in_ref[0:two_d, :]                      # (2d, TB)
        x1 = in_ref[two_d:2 * two_d, :]              # (2d, TB)
        t0 = in_ref[2 * two_d:2 * two_d + 1, :]      # (1, TB)
        t1 = in_ref[2 * two_d + 1:2 * two_d + 2, :]  # (1, TB)

        # --- column constants: static slices of the resident const slab ------
        b1 = c_ref[0:width, 0:1]     # (W, 1)
        b2 = c_ref[0:width, 1:2]     # (W, 1)
        w3 = c_ref[0:width, 2:3]     # (W, 1)   last Hamiltonian layer weight
        fb1 = c_ref[0:fwidth, 3:4]   # (Wf, 1)
        fw1 = c_ref[0:fwidth, 4:5]   # (Wf, 1)  force layer-1 weight column
        fb2 = c_ref[0:two_d, 5:6]    # (2d, 1)  force bias, zero on p-half

        dt = t1 - t0                 # (1, TB)
        t_mid = 0.5 * (t0 + t1)      # (1, TB)
        z = 0.5 * (x0 + x1)          # (2d, TB) midpoint

        # --- Hamiltonian MLP hidden activations (value itself not needed) ----
        h1 = jnp.tanh(jnp.dot(w1_ref[...], z,
                              preferred_element_type=jnp.float32) + b1)   # (W, TB)
        h2 = jnp.tanh(jnp.dot(w2_ref[...], h1,
                              preferred_element_type=jnp.float32) + b2)   # (W, TB)

        # --- exact gradient dH/dz via manual backprop through the two tanh layers
        d2 = w3 * (1.0 - h2 * h2)                                          # (W, TB)
        d1 = jnp.dot(w2t_ref[...], d2,
                     preferred_element_type=jnp.float32) * (1.0 - h1 * h1)  # (W, TB)

        # --- symplectic rotation + resistance, pre-folded into a_phi ---------
        # phi = (W1 @ (J - diag([R, 0]))).T @ d1
        phi = jnp.dot(aphi_ref[...], d1,
                      preferred_element_type=jnp.float32)                  # (2d, TB)

        # --- force MLP: first layer is a K=1 outer product -> VPU broadcast --
        fh = jnp.tanh(fw1 * t_mid + fb1)                                   # (Wf, TB)
        phi = phi + jnp.dot(fw2_ref[...], fh,
                            preferred_element_type=jnp.float32) + fb2      # (2d, TB)

        out_ref[...] = x0 + dt * phi

    return kernel


# --------------------------- parameter preparation ---------------------------
def prepare_hnn_params(params):
    """One-time layout work: J/R folding, transposes, padding, constant packing."""
    dim = params["dim"]
    two_d = 2 * dim
    W1 = jnp.asarray(params["W1"], jnp.float32)        # (W, 2d)
    b1 = jnp.asarray(params["b1"], jnp.float32)
    W2 = jnp.asarray(params["W2"], jnp.float32)        # (W, W)
    b2 = jnp.asarray(params["b2"], jnp.float32)
    W3 = jnp.asarray(params["W3"], jnp.float32)        # (1, W)
    sqrt_r = jnp.asarray(params["sqrt_r_diag"], jnp.float32)
    FW1 = jnp.asarray(params["FW1"], jnp.float32)      # (Wf, 1)
    Fb1 = jnp.asarray(params["Fb1"], jnp.float32)
    FW2 = jnp.asarray(params["FW2"], jnp.float32)      # (dim, Wf)
    Fb2 = jnp.asarray(params["Fb2"], jnp.float32)

    width = W1.shape[0]
    fwidth = FW1.shape[0]

    # Fold J = [[0, I], [-I, 0]] and resistance diag([R, 0]) into the last
    # backprop weight:  phi = grad @ (J - diag([R,0])) = d1 @ (W1 @ (J - diag([R,0])))
    # Column j < dim  :  -W1[:, dim+j] - R_j * W1[:, j]
    # Column dim + j  :   W1[:, j]
    R = sqrt_r ** 2
    w1_q, w1_p = W1[:, :dim], W1[:, dim:]
    w1_phi = jnp.concatenate([-w1_p - w1_q * R[None, :], w1_q], axis=1)   # (W, 2d)
    a_phi = jnp.asarray(w1_phi.T, jnp.float32)                            # (2d, W)

    # Force layer-2 weight padded with zeros on the p-half of the output.
    fw2_pad = jnp.concatenate(
        [FW2, jnp.zeros((dim, fwidth), jnp.float32)], axis=0)             # (2d, Wf)

    # Column-constant slab (Rc rows, 8 cols; cols 0..5 used).
    Rc = _round_up(max(width, fwidth, two_d), 8)

    def col(v):
        v = jnp.asarray(v, jnp.float32).reshape(-1)
        return jnp.pad(v, (0, Rc - v.shape[0]))

    const_slab = jnp.stack([
        col(b1),                                                     # 0: b1
        col(b2),                                                     # 1: b2
        col(W3.reshape(-1)),                                         # 2: last-layer weight
        col(Fb1),                                                    # 3: force bias 1
        col(FW1.reshape(-1)),                                        # 4: force layer-1 weight
        col(jnp.concatenate([Fb2, jnp.zeros((dim,), jnp.float32)])), # 5: force bias 2, padded
        jnp.zeros((Rc,), jnp.float32),                               # 6: pad
        jnp.zeros((Rc,), jnp.float32),                               # 7: pad
    ], axis=1).astype(jnp.float32)                                   # (Rc, 8)

    return {
        "w1": W1,                               # (W, 2d)
        "w2": W2,                               # (W, W)
        "w2t": jnp.asarray(W2.T, jnp.float32),  # (W, W)
        "a_phi": a_phi,                         # (2d, W)   J + R folded
        "fw2_pad": fw2_pad,                     # (2d, Wf)
        "const_slab": const_slab,               # (Rc, 8)
    }


# ------------------------------- forward -------------------------------------
@jax.jit
def hamiltonian_net_forward(x0, x1, t0, t1, prep):
    B, two_d = x0.shape
    dim = two_d // 2
    width = prep["w1"].shape[0]
    fwidth = prep["fw2_pad"].shape[1]
    Rc = prep["const_slab"].shape[0]

    # Lane tiling over the batch (batch lives on the 128-lane axis).
    # B <= 128 -> single grid step (best for single-core v5e/v6e).
    # B  > 128 -> two (or a few, capped) "parallel" tiles so v7x can use both
    #             TensorCores; tile width capped so VMEM stays small if B grows.
    # TODO(synk): on v7x, pltpu.CORE_PARALLEL (or pl.core_map) would guarantee
    # cross-core sharding; kept plain "parallel" for portability across chips.
    if B <= 128:
        TB = 128
    else:
        TB = min(_round_up((B + 1) // 2, 128), 1024)
    Bp = _round_up(B, TB)
    grid = (Bp // TB,)

    # Pack the four per-example inputs into ONE feature-major slab -> a single
    # lane-dense DMA per grid step instead of four tiny ones.
    S = _round_up(2 * two_d + 2, 8)
    slab = jnp.concatenate([x0.T, x1.T, t0.T, t1.T], axis=0)   # (2*2d+2, B)
    slab = jnp.pad(slab, ((0, S - slab.shape[0]), (0, Bp - B)))

    def resident(shape):   # weights/constants stay pinned across all grid steps
        return pl.BlockSpec(shape, lambda i: (0, 0))

    out = pl.pallas_call(
        make_hnn_kernel(dim, width, fwidth),
        out_shape=jax.ShapeDtypeStruct((two_d, Bp), jnp.float32),
        grid=grid,
        in_specs=[
            pl.BlockSpec((S, TB), lambda i: (0, i)),   # packed per-tile inputs
            resident((width, two_d)),                  # w1
            resident((width, width)),                  # w2
            resident((width, width)),                  # w2t
            resident((two_d, width)),                  # a_phi (J + resistance folded)
            resident((two_d, fwidth)),                 # fw2_pad
            resident((Rc, 8)),                         # const slab
        ],
        out_specs=pl.BlockSpec((two_d, TB), lambda i: (0, i)),
        compiler_params=pltpu.CompilerParams(
            dimension_semantics=("parallel",)),
    )(slab, prep["w1"], prep["w2"], prep["w2t"],
      prep["a_phi"], prep["fw2_pad"], prep["const_slab"])

    return out[:, :B].T


# ----------------------------- pure-JAX reference -----------------------------
def reference_forward(x0, x1, t0, t1, params):
    dim = params["dim"]
    W1, b1, W2, b2, W3, b3 = (params["W1"], params["b1"], params["W2"],
                              params["b2"], params["W3"], params["b3"])

    def H(z):
        h1 = jnp.tanh(z @ W1.T + b1)
        h2 = jnp.tanh(h1 @ W2.T + b2)
        return (h2 @ W3.T + b3)[0]

    z = 0.5 * (x0 + x1)
    grad = jax.vmap(jax.grad(H))(z)

    J = np.zeros((2 * dim, 2 * dim), np.float32)
    J[:dim, dim:] = np.eye(dim)
    J[dim:, :dim] = -np.eye(dim)
    phi = grad @ jnp.asarray(J)

    R_diag = params["sqrt_r_diag"] ** 2
    phi = phi.at[:, :dim].add(-grad[:, :dim] * R_diag)

    t_mid = 0.5 * (t0 + t1)
    fh = jnp.tanh(t_mid @ params["FW1"].T + params["Fb1"])
    force = fh @ params["FW2"].T + params["Fb2"]
    phi = phi.at[:, :dim].add(force)

    return x0 + (t1 - t0) * phi


if __name__ == "__main__":
    B, dim, width, force_width = 256, 4, 32, 32
    two_d = 2 * dim

    key = jax.random.PRNGKey(0)
    ks = jax.random.split(key, 16)

    def init(k, shape, scale):
        return (scale * jax.random.normal(k, shape)).astype(jnp.float32)

    params = {
        "dim": dim,
        # Hamiltonian MLP: 2*dim -> width -> width -> 1
        "W1": init(ks[0], (width, two_d), 1.0 / np.sqrt(two_d)),
        "b1": init(ks[1], (width,), 0.1),
        "W2": init(ks[2], (width, width), 1.0 / np.sqrt(width)),
        "b2": init(ks[3], (width,), 0.1),
        "W3": init(ks[4], (1, width), 1.0 / np.sqrt(width)),
        "b3": init(ks[5], (1,), 0.1),
        # resistance
        "sqrt_r_diag": init(ks[6], (dim,), 0.5),
        # force MLP: 1 -> force_width -> dim
        "FW1": init(ks[7], (force_width, 1), 1.0),
        "Fb1": init(ks[8], (force_width,), 0.1),
        "FW2": init(ks[9], (dim, force_width), 1.0 / np.sqrt(force_width)),
        "Fb2": init(ks[10], (dim,), 0.1),
    }

    x0 = init(ks[11], (B, two_d), 1.0)
    x1 = x0 + init(ks[12], (B, two_d), 0.05)
    t0 = jnp.zeros((B, 1), jnp.float32) + 0.1 * jax.random.uniform(ks[13], (B, 1))
    t1 = t0 + 0.05 + 0.05 * jax.random.uniform(ks[14], (B, 1))

    # one-time parameter layout (hoisted out of the per-call path)
    prep = prepare_hnn_params(params)
    prep = jax.tree_util.tree_map(jax.block_until_ready, prep)

    out = hamiltonian_net_forward(x0, x1, t0, t1, prep)
    out = jax.block_until_ready(out)

    ref = jax.block_until_ready(reference_forward(x0, x1, t0, t1, params))
    np.testing.assert_allclose(np.asarray(out), np.asarray(ref), rtol=1e-4, atol=1e-5)

    # TODO(synk): `flow_map` uses scipy.optimize.root (iterative implicit solve) and is
    # not part of the forward pass; it is not implemented as a kernel.
    print("KERNEL_OK")
</pallas_src>

<mosaic_0001>
module attributes {stable_mosaic.version = 11 : i64} {
  func.func @kernel(%arg0: i32, %arg1: memref<24x128xf32, #tpu.memory_space<vmem>>, %arg2: memref<32x8xf32, #tpu.memory_space<vmem>>, %arg3: memref<32x32xf32, #tpu.memory_space<vmem>>, %arg4: memref<32x32xf32, #tpu.memory_space<vmem>>, %arg5: memref<8x32xf32, #tpu.memory_space<vmem>>, %arg6: memref<8x32xf32, #tpu.memory_space<vmem>>, %arg7: memref<32x8xf32, #tpu.memory_space<vmem>>, %arg8: memref<8x128xf32, #tpu.memory_space<vmem>>) attributes {dimension_semantics = [#tpu.dimension_semantics<parallel>], iteration_bounds = array<i64: 2>, scalar_prefetch = 0 : i64, scratch_operands = 0 : i64, tpu.core_type = #tpu.core_type<tc>, window_params = [{transform_indices = @transform_0, window_bounds = array<i64: 24, 128>}, {pipeline_mode = #tpu.pipeline_mode<synchronous>, transform_indices = @transform_1, window_bounds = array<i64: 32, 8>}, {pipeline_mode = #tpu.pipeline_mode<synchronous>, transform_indices = @transform_2, window_bounds = array<i64: 32, 32>}, {pipeline_mode = #tpu.pipeline_mode<synchronous>, transform_indices = @transform_3, window_bounds = array<i64: 32, 32>}, {pipeline_mode = #tpu.pipeline_mode<synchronous>, transform_indices = @transform_4, window_bounds = array<i64: 8, 32>}, {pipeline_mode = #tpu.pipeline_mode<synchronous>, transform_indices = @transform_5, window_bounds = array<i64: 8, 32>}, {pipeline_mode = #tpu.pipeline_mode<synchronous>, transform_indices = @transform_6, window_bounds = array<i64: 32, 8>}, {transform_indices = @transform_7, window_bounds = array<i64: 8, 128>}]} {
    %c0 = arith.constant 0 : index
    %c0_0 = arith.constant 0 : index
    %0 = vector.load %arg1[%c0, %c0_0] : memref<24x128xf32, #tpu.memory_space<vmem>>, vector<8x128xf32>
    %c8 = arith.constant 8 : index
    %c0_1 = arith.constant 0 : index
    %1 = vector.load %arg1[%c8, %c0_1] : memref<24x128xf32, #tpu.memory_space<vmem>>, vector<8x128xf32>
    %c16 = arith.constant 16 : index
    %c0_2 = arith.constant 0 : index
    %2 = vector.load %arg1[%c16, %c0_2] : memref<24x128xf32, #tpu.memory_space<vmem>>, vector<1x128xf32>
    %c17 = arith.constant 17 : index
    %c0_3 = arith.constant 0 : index
    %3 = vector.load %arg1[%c17, %c0_3] : memref<24x128xf32, #tpu.memory_space<vmem>>, vector<1x128xf32>
    %c0_4 = arith.constant 0 : index
    %c0_5 = arith.constant 0 : index
    %4 = vector.load %arg7[%c0_4, %c0_5] : memref<32x8xf32, #tpu.memory_space<vmem>>, vector<32x1xf32>
    %c0_6 = arith.constant 0 : index
    %c1 = arith.constant 1 : index
    %5 = vector.load %arg7[%c0_6, %c1] : memref<32x8xf32, #tpu.memory_space<vmem>>, vector<32x1xf32>
    %c0_7 = arith.constant 0 : index
    %c2 = arith.constant 2 : index
    %6 = vector.load %arg7[%c0_7, %c2] : memref<32x8xf32, #tpu.memory_space<vmem>>, vector<32x1xf32>
    %c0_8 = arith.constant 0 : index
    %c3 = arith.constant 3 : index
    %7 = vector.load %arg7[%c0_8, %c3] : memref<32x8xf32, #tpu.memory_space<vmem>>, vector<32x1xf32>
    %c0_9 = arith.constant 0 : index
    %c4 = arith.constant 4 : index
    %8 = vector.load %arg7[%c0_9, %c4] : memref<32x8xf32, #tpu.memory_space<vmem>>, vector<32x1xf32>
    %c0_10 = arith.constant 0 : index
    %c5 = arith.constant 5 : index
    %9 = vector.load %arg7[%c0_10, %c5] : memref<32x8xf32, #tpu.memory_space<vmem>>, vector<8x1xf32>
    %10 = arith.subf %3, %2 : vector<1x128xf32>
    %11 = arith.addf %2, %3 : vector<1x128xf32>
    %cst = arith.constant 5.000000e-01 : f32
    %12 = vector.broadcast %cst : f32 to vector<1x128xf32>
    %13 = arith.mulf %12, %11 : vector<1x128xf32>
    %14 = arith.addf %0, %1 : vector<8x128xf32>
    %cst_11 = arith.constant 5.000000e-01 : f32
    %15 = vector.broadcast %cst_11 : f32 to vector<8x128xf32>
    %16 = arith.mulf %15, %14 : vector<8x128xf32>
    %c0_12 = arith.constant 0 : index
    %c0_13 = arith.constant 0 : index
    %17 = vector.load %arg2[%c0_12, %c0_13] : memref<32x8xf32, #tpu.memory_space<vmem>>, vector<32x8xf32>
    %cst_14 = arith.constant dense<0.000000e+00> : vector<32x128xf32>
    %18 = tpu.matmul %17, %16, %cst_14 {dimension_numbers = #tpu.dot_dimension_numbers<[1], [0], [0], [1], [0, 0, 1, 1], [], []>} : vector<32x8xf32>, vector<8x128xf32>, vector<32x128xf32> -> vector<32x128xf32>
    %19 = vector.broadcast %4 : vector<32x1xf32> to vector<32x128xf32>
    %20 = arith.addf %18, %19 : vector<32x128xf32>
    %21 = math.tanh %20 : vector<32x128xf32>
    %c0_15 = arith.constant 0 : index
    %c0_16 = arith.constant 0 : index
    %22 = vector.load %arg3[%c0_15, %c0_16] : memref<32x32xf32, #tpu.memory_space<vmem>>, vector<32x32xf32>
    %cst_17 = arith.constant dense<0.000000e+00> : vector<32x128xf32>
    %23 = tpu.matmul %22, %21, %cst_17 {dimension_numbers = #tpu.dot_dimension_numbers<[1], [0], [0], [1], [0, 0, 1, 1], [], []>} : vector<32x32xf32>, vector<32x128xf32>, vector<32x128xf32> -> vector<32x128xf32>
    %24 = vector.broadcast %5 : vector<32x1xf32> to vector<32x128xf32>
    %25 = arith.addf %23, %24 : vector<32x128xf32>
    %26 = math.tanh %25 : vector<32x128xf32>
    %27 = arith.mulf %26, %26 : vector<32x128xf32>
    %cst_18 = arith.constant 1.000000e+00 : f32
    %28 = vector.broadcast %cst_18 : f32 to vector<32x128xf32>
    %29 = arith.subf %28, %27 : vector<32x128xf32>
    %30 = vector.broadcast %6 : vector<32x1xf32> to vector<32x128xf32>
    %31 = arith.mulf %30, %29 : vector<32x128xf32>
    %c0_19 = arith.constant 0 : index
    %c0_20 = arith.constant 0 : index
    %32 = vector.load %arg4[%c0_19, %c0_20] : memref<32x32xf32, #tpu.memory_space<vmem>>, vector<32x32xf32>
    %cst_21 = arith.constant dense<0.000000e+00> : vector<32x128xf32>
    %33 = tpu.matmul %32, %31, %cst_21 {dimension_numbers = #tpu.dot_dimension_numbers<[1], [0], [0], [1], [0, 0, 1, 1], [], []>} : vector<32x32xf32>, vector<32x128xf32>, vector<32x128xf32> -> vector<32x128xf32>
    %34 = arith.mulf %21, %21 : vector<32x128xf32>
    %cst_22 = arith.constant 1.000000e+00 : f32
    %35 = vector.broadcast %cst_22 : f32 to vector<32x128xf32>
    %36 = arith.subf %35, %34 : vector<32x128xf32>
    %37 = arith.mulf %33, %36 : vector<32x128xf32>
    %c0_23 = arith.constant 0 : index
    %c0_24 = arith.constant 0 : index
    %38 = vector.load %arg5[%c0_23, %c0_24] : memref<8x32xf32, #tpu.memory_space<vmem>>, vector<8x32xf32>
    %cst_25 = arith.constant dense<0.000000e+00> : vector<8x128xf32>
    %39 = tpu.matmul %38, %37, %cst_25 {dimension_numbers = #tpu.dot_dimension_numbers<[1], [0], [0], [1], [0, 0, 1, 1], [], []>} : vector<8x32xf32>, vector<32x128xf32>, vector<8x128xf32> -> vector<8x128xf32>
    %40 = vector.broadcast %8 : vector<32x1xf32> to vector<32x128xf32>
    %41 = vector.broadcast %13 : vector<1x128xf32> to vector<32x128xf32>
    %42 = arith.mulf %40, %41 : vector<32x128xf32>
    %43 = vector.broadcast %7 : vector<32x1xf32> to vector<32x128xf32>
    %44 = arith.addf %42, %43 : vector<32x128xf32>
    %45 = math.tanh %44 : vector<32x128xf32>
    %c0_26 = arith.constant 0 : index
    %c0_27 = arith.constant 0 : index
    %46 = vector.load %arg6[%c0_26, %c0_27] : memref<8x32xf32, #tpu.memory_space<vmem>>, vector<8x32xf32>
    %cst_28 = arith.constant dense<0.000000e+00> : vector<8x128xf32>
    %47 = tpu.matmul %46, %45, %cst_28 {dimension_numbers = #tpu.dot_dimension_numbers<[1], [0], [0], [1], [0, 0, 1, 1], [], []>} : vector<8x32xf32>, vector<32x128xf32>, vector<8x128xf32> -> vector<8x128xf32>
    %48 = arith.addf %39, %47 : vector<8x128xf32>
    %49 = vector.broadcast %9 : vector<8x1xf32> to vector<8x128xf32>
    %50 = arith.addf %48, %49 : vector<8x128xf32>
    %51 = vector.broadcast %10 : vector<1x128xf32> to vector<8x128xf32>
    %52 = arith.mulf %51, %50 : vector<8x128xf32>
    %53 = arith.addf %0, %52 : vector<8x128xf32>
    %c0_29 = arith.constant 0 : index
    %c0_30 = arith.constant 0 : index
    %54 = vector.load %arg8[%c0_29, %c0_30] : memref<8x128xf32, #tpu.memory_space<vmem>>, vector<8x128xf32>
    tpu.vector_store %arg8[%c0_29, %c0_30], %53 {strides = array<i32>} : memref<8x128xf32, #tpu.memory_space<vmem>>, vector<8x128xf32>,
    return
  }
  func.func @transform_0(%arg0: i32) -> (i32, i32) {
    %c0_i32 = arith.constant 0 : i32
    %c0_i32_0 = arith.constant 0 : i32
    return %c0_i32, %arg0 : i32, i32
  }
  func.func @transform_1(%arg0: i32) -> (i32, i32) {
    %c0_i32 = arith.constant 0 : i32
    %c0_i32_0 = arith.constant 0 : i32
    %c0_i32_1 = arith.constant 0 : i32
    return %c0_i32, %c0_i32_0 : i32, i32
  }
  func.func @transform_2(%arg0: i32) -> (i32, i32) {
    %c0_i32 = arith.constant 0 : i32
    %c0_i32_0 = arith.constant 0 : i32
    %c0_i32_1 = arith.constant 0 : i32
    return %c0_i32, %c0_i32_0 : i32, i32
  }
  func.func @transform_3(%arg0: i32) -> (i32, i32) {
    %c0_i32 = arith.constant 0 : i32
    %c0_i32_0 = arith.constant 0 : i32
    %c0_i32_1 = arith.constant 0 : i32
    return %c0_i32, %c0_i32_0 : i32, i32
  }
  func.func @transform_4(%arg0: i32) -> (i32, i32) {
    %c0_i32 = arith.constant 0 : i32
    %c0_i32_0 = arith.constant 0 : i32
    %c0_i32_1 = arith.constant 0 : i32
    return %c0_i32, %c0_i32_0 : i32, i32
  }
  func.func @transform_5(%arg0: i32) -> (i32, i32) {
    %c0_i32 = arith.constant 0 : i32
    %c0_i32_0 = arith.constant 0 : i32
    %c0_i32_1 = arith.constant 0 : i32
    return %c0_i32, %c0_i32_0 : i32, i32
  }
  func.func @transform_6(%arg0: i32) -> (i32, i32) {
    %c0_i32 = arith.constant 0 : i32
    %c0_i32_0 = arith.constant 0 : i32
    %c0_i32_1 = arith.constant 0 : i32
    return %c0_i32, %c0_i32_0 : i32, i32
  }
  func.func @transform_7(%arg0: i32) -> (i32, i32) {
    %c0_i32 = arith.constant 0 : i32
    %c0_i32_0 = arith.constant 0 : i32
    return %c0_i32, %arg0 : i32, i32
  }
}

</mosaic_0001>

<llo_original>
// kernel: hamiltonian_net_forward.1
$region0: #{hamiltonian_net_forward.1}
  #allocation0 [shape = 'u32[]', space=smem, size = 0x4, offset = 0x4, fixed_abs, tag = 'smem constant byte address 0x4 - core index']
  #allocation1 [shape = 'u32[144,128]{1,0:T(1,128)}', space=vmem, size = 0x12000, scoped, tag = 'internal scratch']
  %s0 = inlined_call_operand.vmem [shape: f32[24,256], index: 0, kind: input, shape index: {}]
  %s1 = inlined_call_operand.vmem [shape: f32[32,8], index: 1, kind: input, shape index: {}]
  %s2 = inlined_call_operand.vmem [shape: f32[32,32], index: 2, kind: input, shape index: {}]
  %s3 = inlined_call_operand.vmem [shape: f32[32,32], index: 3, kind: input, shape index: {}]
  %s4 = inlined_call_operand.vmem [shape: f32[8,32], index: 4, kind: input, shape index: {}]
  %s5 = inlined_call_operand.vmem [shape: f32[8,32], index: 5, kind: input, shape index: {}]
  %s6 = inlined_call_operand.vmem [shape: f32[32,8], index: 6, kind: input, shape index: {}]
  %s7 = inlined_call_operand.hbm [shape: f32[8,256], index: 7, kind: output, shape index: {}]
  %s8 = sld [smem:[#allocation0]]
  $region99: #{hamiltonian_net_forward.1} parent=0
    _
  %s10 = ssub.s32 1, %s8
  %s11 = scalar_select 0, %s10, %s8
  $region1: #{hamiltonian_net_forward.1} parent=0
    #allocation2 [shape = 'u8[24576]{0}', space=vmem, size = 0x6000, scoped, tag = 'input window, operand 0']
    #allocation3 [shape = 'u8[8192]{0}', space=vmem, size = 0x2000, scoped, tag = 'output window, operand 0']
    #allocation4 [shape = 's32[2]{0}', space=sflag, size = 0x8, scoped, tag = 'scoped memory for hamiltonian_net_forward.1']
    %12 = vsyncpa [#allocation4], 0
    %s13 = scalar_lea.sflag [#allocation4], 1
    %14 = vsyncpa %s13, 0
    loop: start=0, step=1, limit=4
    $region2: #{hamiltonian_net_forward.1} parent=1 // loop_pre_header
      _
    $region3: #{hamiltonian_net_forward.1} parent=1 // loop_header
      %s16 = sphi 0, %s20
      %p17 = scmp.ge.s32.totalorder %s16, 4
      %s26 = sphi 0, %s28
      %s29 = sphi 0, %s26
      %s30 = sphi 0, %s29
      %s46 = sphi 0, %s30
      %s50 = sphi 0, %s50
      %s52 = sphi 0, %s50
      %s53 = sphi 0, %s52
      %s67 = sphi 0, %s53
      %s71 = sphi 0, %s71
      %s73 = sphi 0, %s71
      %s74 = sphi 0, %s73
      %s88 = sphi 0, %s74
      %s92 = sphi 0, %s92
      %s94 = sphi 0, %s92
      %s95 = sphi 0, %s94
      %s109 = sphi 0, %s95
      %s113 = sphi 0, %s113
      %s115 = sphi 0, %s113
      %s116 = sphi 0, %s115
      %s130 = sphi 0, %s116
      %s134 = sphi 0, %s134
      %s136 = sphi 0, %s134
      %s137 = sphi 0, %s136
      %s151 = sphi 0, %s137
      %s155 = sphi 0, %s155
      %s157 = sphi 0, %s155
      %s158 = sphi 0, %s157
      %s172 = sphi 0, %s158
      %s178 = sphi 0, %s180
      %s181 = sphi 0, %s178
      %s182 = sphi 0, %s181
      %s198 = sphi 0, %s182
    $region4: #{hamiltonian_net_forward.1} parent=1 // loop_header_branch
      %19 = sbr.rel (%p17) target = $region8
    $region5: #{hamiltonian_net_forward.1} parent=1 // loop_body
      %s21 = ssub.s32 %s16, 1
      %s22 = ssub.s32 %s16, 2
      %s23 = sadd.s32 %s16, 1
      %s24 = ssub.s32 %s16, %s23
      %p25 = scmp.eq.s32.totalorder %s24, 0
      %s27 = sadd.s32 %s26, 1
      %s28 = scalar_select %p25, %s26, %s27
      %p31 = pneg %p25
      %p32 = scmp.eq.s32.totalorder %s16, 1
      %p33 = por %p31, %p32
      %p34 = scmp.ne.s32.totalorder %s26, %s29
      %p35 = scmp.eq.s32.totalorder %s16, 0
      %p36 = por %p34, %p35
      %p37 = scmp.ne.s32.totalorder %s26, %s29
      %p38 = scmp.eq.s32.totalorder %s21, 1
      %p39 = por %p37, %p38
      %p40 = scmp.ne.s32.totalorder %s29, %s30
      %p41 = scmp.eq.s32.totalorder %s21, 0
      %p42 = por %p40, %p41
      %p43 = scmp.ne.s32.totalorder %s29, %s30
      %p44 = scmp.eq.s32.totalorder %s22, 1
      %p45 = por %p43, %p44
      %p47 = scmp.ne.s32.totalorder %s30, %s46
      %p48 = scmp.eq.s32.totalorder %s22, 0
      %p49 = por %p47, %p48
      %s51 = sadd.s32 %s50, 1
      %p54 = scmp.eq.s32.totalorder %s16, 1
      %p55 = scmp.ne.s32.totalorder %s50, %s52
      %p56 = scmp.eq.s32.totalorder %s16, 0
      %p57 = por %p55, %p56
      %p58 = scmp.ne.s32.totalorder %s50, %s52
      %p59 = scmp.eq.s32.totalorder %s21, 1
      %p60 = por %p58, %p59
      %p61 = scmp.ne.s32.totalorder %s52, %s53
      %p62 = scmp.eq.s32.totalorder %s21, 0
      %p63 = por %p61, %p62
      %p64 = scmp.ne.s32.totalorder %s52, %s53
      %p65 = scmp.eq.s32.totalorder %s22, 1
      %p66 = por %p64, %p65
      %p68 = scmp.ne.s32.totalorder %s53, %s67
      %p69 = scmp.eq.s32.totalorder %s22, 0
      %p70 = por %p68, %p69
      %s72 = sadd.s32 %s71, 1
      %p75 = scmp.eq.s32.totalorder %s16, 1
      %p76 = scmp.ne.s32.totalorder %s71, %s73
      %p77 = scmp.eq.s32.totalorder %s16, 0
      %p78 = por %p76, %p77
      %p79 = scmp.ne.s32.totalorder %s71, %s73
      %p80 = scmp.eq.s32.totalorder %s21, 1
      %p81 = por %p79, %p80
      %p82 = scmp.ne.s32.totalorder %s73, %s74
      %p83 = scmp.eq.s32.totalorder %s21, 0
      %p84 = por %p82, %p83
      %p85 = scmp.ne.s32.totalorder %s73, %s74
      %p86 = scmp.eq.s32.totalorder %s22, 1
      %p87 = por %p85, %p86
      %p89 = scmp.ne.s32.totalorder %s74, %s88
      %p90 = scmp.eq.s32.totalorder %s22, 0
      %p91 = por %p89, %p90
      %s93 = sadd.s32 %s92, 1
      %p96 = scmp.eq.s32.totalorder %s16, 1
      %p97 = scmp.ne.s32.totalorder %s92, %s94
      %p98 = scmp.eq.s32.totalorder %s16, 0
      %p99 = por %p97, %p98
      %p100 = scmp.ne.s32.totalorder %s92, %s94
      %p101 = scmp.eq.s32.totalorder %s21, 1
      %p102 = por %p100, %p101
      %p103 = scmp.ne.s32.totalorder %s94, %s95
      %p104 = scmp.eq.s32.totalorder %s21, 0
      %p105 = por %p103, %p104
      %p106 = scmp.ne.s32.totalorder %s94, %s95
      %p107 = scmp.eq.s32.totalorder %s22, 1
      %p108 = por %p106, %p107
      %p110 = scmp.ne.s32.totalorder %s95, %s109
      %p111 = scmp.eq.s32.totalorder %s22, 0
      %p112 = por %p110, %p111
      %s114 = sadd.s32 %s113, 1
      %p117 = scmp.eq.s32.totalorder %s16, 1
      %p118 = scmp.ne.s32.totalorder %s113, %s115
      %p119 = scmp.eq.s32.totalorder %s16, 0
      %p120 = por %p118, %p119
      %p121 = scmp.ne.s32.totalorder %s113, %s115
      %p122 = scmp.eq.s32.totalorder %s21, 1
      %p123 = por %p121, %p122
      %p124 = scmp.ne.s32.totalorder %s115, %s116
      %p125 = scmp.eq.s32.totalorder %s21, 0
      %p126 = por %p124, %p125
      %p127 = scmp.ne.s32.totalorder %s115, %s116
      %p128 = scmp.eq.s32.totalorder %s22, 1
      %p129 = por %p127, %p128
      %p131 = scmp.ne.s32.totalorder %s116, %s130
      %p132 = scmp.eq.s32.totalorder %s22, 0
      %p133 = por %p131, %p132
      %s135 = sadd.s32 %s134, 1
      %p138 = scmp.eq.s32.totalorder %s16, 1
      %p139 = scmp.ne.s32.totalorder %s134, %s136
      %p140 = scmp.eq.s32.totalorder %s16, 0
      %p141 = por %p139, %p140
      %p142 = scmp.ne.s32.totalorder %s134, %s136
      %p143 = scmp.eq.s32.totalorder %s21, 1
      %p144 = por %p142, %p143
      %p145 = scmp.ne.s32.totalorder %s136, %s137
      %p146 = scmp.eq.s32.totalorder %s21, 0
      %p147 = por %p145, %p146
      %p148 = scmp.ne.s32.totalorder %s136, %s137
      %p149 = scmp.eq.s32.totalorder %s22, 1
      %p150 = por %p148, %p149
      %p152 = scmp.ne.s32.totalorder %s137, %s151
      %p153 = scmp.eq.s32.totalorder %s22, 0
      %p154 = por %p152, %p153
      %s156 = sadd.s32 %s155, 1
      %p159 = scmp.eq.s32.totalorder %s16, 1
      %p160 = scmp.ne.s32.totalorder %s155, %s157
      %p161 = scmp.eq.s32.totalorder %s16, 0
      %p162 = por %p160, %p161
      %p163 = scmp.ne.s32.totalorder %s155, %s157
      %p164 = scmp.eq.s32.totalorder %s21, 1
      %p165 = por %p163, %p164
      %p166 = scmp.ne.s32.totalorder %s157, %s158
      %p167 = scmp.eq.s32.totalorder %s21, 0
      %p168 = por %p166, %p167
      %p169 = scmp.ne.s32.totalorder %s157, %s158
      %p170 = scmp.eq.s32.totalorder %s22, 1
      %p171 = por %p169, %p170
      %p173 = scmp.ne.s32.totalorder %s158, %s172
      %p174 = scmp.eq.s32.totalorder %s22, 0
      %p175 = por %p173, %p174
      %s176 = ssub.s32 %s16, %s23
      %p177 = scmp.eq.s32.totalorder %s176, 0
      %s179 = sadd.s32 %s178, 1
      %s180 = scalar_select %p177, %s178, %s179
      %p183 = pneg %p177
      %p184 = scmp.eq.s32.totalorder %s16, 1
      %p185 = por %p183, %p184
      %p186 = scmp.ne.s32.totalorder %s178, %s181
      %p187 = scmp.eq.s32.totalorder %s16, 0
      %p188 = por %p186, %p187
      %p189 = scmp.ne.s32.totalorder %s178, %s181
      %p190 = scmp.eq.s32.totalorder %s21, 1
      %p191 = por %p189, %p190
      %p192 = scmp.ne.s32.totalorder %s181, %s182
      %p193 = scmp.eq.s32.totalorder %s21, 0
      %p194 = por %p192, %p193
      %p195 = scmp.ne.s32.totalorder %s181, %s182
      %p196 = scmp.eq.s32.totalorder %s22, 1
      %p197 = por %p195, %p196
      %p199 = scmp.ne.s32.totalorder %s182, %s198
      %p200 = scmp.eq.s32.totalorder %s22, 0
      %p201 = por %p199, %p200
      %p202 = scmp.le.s32.totalorder 1, %s16
      %p203 = scmp.lt.s32.totalorder %s16, 3
      %p204 = pnand %p202, %p203
      %p205 = pneg %p204
      // Predicated region
      $region9: #{hamiltonian_net_forward.1} parent=5 // pred_check
        _
      $region10: #{hamiltonian_net_forward.1} parent=5 // pred_check_branch
        %207 = sbr.rel (%p204) target = $region12
      $region11: #{hamiltonian_net_forward.1} parent=5 // pred_region
        %s208 = ssub.s32 %s16, 1
        // Predicated region
        $region13: #{hamiltonian_net_forward.1} parent=11 // pred_check
          %p209 = pneg %p63
        $region14: #{hamiltonian_net_forward.1} parent=11 // pred_check_branch
          %211 = sbr.rel (%p209) target = $region16
        $region15: #{hamiltonian_net_forward.1} parent=11 // pred_region
          _
        $region16: #{hamiltonian_net_forward.1} parent=11 // pred_fallthru
          _
        // Predicated region
        $region17: #{hamiltonian_net_forward.1} parent=11 // pred_check
          %p212 = pneg %p84
        $region18: #{hamiltonian_net_forward.1} parent=11 // pred_check_branch
          %214 = sbr.rel (%p212) target = $region20
        $region19: #{hamiltonian_net_forward.1} parent=11 // pred_region
          _
        $region20: #{hamiltonian_net_forward.1} parent=11 // pred_fallthru
          _
        // Predicated region
        $region21: #{hamiltonian_net_forward.1} parent=11 // pred_check
          %p215 = pneg %p105
        $region22: #{hamiltonian_net_forward.1} parent=11 // pred_check_branch
          %217 = sbr.rel (%p215) target = $region24
        $region23: #{hamiltonian_net_forward.1} parent=11 // pred_region
          _
        $region24: #{hamiltonian_net_forward.1} parent=11 // pred_fallthru
          _
        // Predicated region
        $region25: #{hamiltonian_net_forward.1} parent=11 // pred_check
          %p218 = pneg %p126
        $region26: #{hamiltonian_net_forward.1} parent=11 // pred_check_branch
          %220 = sbr.rel (%p218) target = $region28
        $region27: #{hamiltonian_net_forward.1} parent=11 // pred_region
          _
        $region28: #{hamiltonian_net_forward.1} parent=11 // pred_fallthru
          _
        // Predicated region
        $region29: #{hamiltonian_net_forward.1} parent=11 // pred_check
          %p221 = pneg %p147
        $region30: #{hamiltonian_net_forward.1} parent=11 // pred_check_branch
          %223 = sbr.rel (%p221) target = $region32
        $region31: #{hamiltonian_net_forward.1} parent=11 // pred_region
          _
        $region32: #{hamiltonian_net_forward.1} parent=11 // pred_fallthru
          _
        // Predicated region
        $region33: #{hamiltonian_net_forward.1} parent=11 // pred_check
          %p224 = pneg %p168
        $region34: #{hamiltonian_net_forward.1} parent=11 // pred_check_branch
          %226 = sbr.rel (%p224) target = $region36
        $region35: #{hamiltonian_net_forward.1} parent=11 // pred_region
          _
        $region36: #{hamiltonian_net_forward.1} parent=11 // pred_fallthru
          _
      $region12: #{hamiltonian_net_forward.1} parent=5 // pred_fallthru
        _
      %p227 = scmp.lt.s32.totalorder %s16, 2
      // Predicated region
      $region37: #{hamiltonian_net_forward.1} parent=5 // pred_check
        %p228 = pneg %p227
      $region38: #{hamiltonian_net_forward.1} parent=5 // pred_check_branch
        %230 = sbr.rel (%p228) target = $region40
      $region39: #{hamiltonian_net_forward.1} parent=5 // pred_region
        // Predicated region
        $region41: #{hamiltonian_net_forward.1} parent=39 // pred_check
          %p231 = pneg %p36
        $region42: #{hamiltonian_net_forward.1} parent=39 // pred_check_branch
          %233 = sbr.rel (%p231) target = $region44
        $region43: #{hamiltonian_net_forward.1} parent=39 // pred_region
          %s234 = sand.u32 %s26, 1
          %s235 = sand.u32 %s26, 1
          %s236 = smul.addr %s235, 24
          %s237 = scalar_lea.vmem [#allocation2], %s236
          %s238 = smul.addr %s16, 8
          %s239 = scalar_lea.vmem %s0, %s238
          // Predicated region
          $region45: #{hamiltonian_net_forward.1} parent=43 // pred_check
            _
          $region46: #{hamiltonian_net_forward.1} parent=43 // pred_check_branch
            %241 = sbr.rel (0) target = $region48
          $region47: #{hamiltonian_net_forward.1} parent=43 // pred_region
            // Predicated region
            $region49: #{hamiltonian_net_forward.1} parent=47 // pred_check
              _
            $region50: #{hamiltonian_net_forward.1} parent=47 // pred_check_branch
              %243 = sbr.rel (0) target = $region52
            $region51: #{hamiltonian_net_forward.1} parent=47 // pred_region
              // Predicated region
              $region64: #{hamiltonian_net_forward.1} parent=51 // pred_check
                _
              $region65: #{hamiltonian_net_forward.1} parent=51 // pred_check_branch
                %263 = sbr.rel (0) target = $region67
              $region66: #{hamiltonian_net_forward.1} parent=51 // pred_region
                loop: start=0, step=1, limit=1
                $region68: #{hamiltonian_net_forward.1} parent=66 // loop_pre_header
                  _
                $region69: #{hamiltonian_net_forward.1} parent=66 // loop_header
                  %s265 = sphi 0, %s269
                  %p266 = scmp.ge.s32.totalorder %s265, 1
                  %s270 = sphi %s239, %s239
                  %s271 = sphi %s237, %s237
                $region70: #{hamiltonian_net_forward.1} parent=66 // loop_header_branch
                  %268 = sbr.rel (%p266) target = $region74
                $region71: #{hamiltonian_net_forward.1} parent=66 // loop_body
                  %v272 = vld [vmem:[%s270] sm:$0xff]
                  %273 = vst [vmem:[%s271] sm:$0xff] %v272
                  %v274 = vld [vmem:[%s270 + $0x10] sm:$0xff]
                  %275 = vst [vmem:[%s271 + $0x8] sm:$0xff] %v274
                  %v276 = vld [vmem:[%s270 + $0x20] sm:$0xff]
                  %277 = vst [vmem:[%s271 + $0x10] sm:$0xff] %v276
                $region72: #{hamiltonian_net_forward.1} parent=66 // loop_footer
                  %s269 = sadd.s32 1, %s265
                $region73: #{hamiltonian_net_forward.1} parent=66 // loop_footer_branch
                  %264 = sbr.rel target = $region69
                $region74: #{hamiltonian_net_forward.1} parent=66 // loop_exit
                  _
              $region67: #{hamiltonian_net_forward.1} parent=51 // pred_fallthru
                _
              // Predicated region
              $region75: #{hamiltonian_net_forward.1} parent=51 // pred_check
                _
              $region76: #{hamiltonian_net_forward.1} parent=51 // pred_check_branch
                %279 = sbr.rel target = $region78
              $region77: #{hamiltonian_net_forward.1} parent=51 // pred_region
                _
              $region78: #{hamiltonian_net_forward.1} parent=51 // pred_fallthru
                _
            $region52: #{hamiltonian_net_forward.1} parent=47 // pred_fallthru
              _
            // Predicated region
            $region53: #{hamiltonian_net_forward.1} parent=47 // pred_check
              _
            $region54: #{hamiltonian_net_forward.1} parent=47 // pred_check_branch
              %245 = sbr.rel target = $region56
            $region55: #{hamiltonian_net_forward.1} parent=47 // pred_region
              %s247 = ssub.s32 256, 1
              loop: start=0, step=1, limit=1
              $region57: #{hamiltonian_net_forward.1} parent=55 // loop_pre_header
                _
              $region58: #{hamiltonian_net_forward.1} parent=55 // loop_header
                %s249 = sphi 0, %s253
                %p250 = scmp.ge.s32.totalorder %s249, 1
                %s254 = sphi %s239, %s239
                %s255 = sphi %s237, %s237
              $region59: #{hamiltonian_net_forward.1} parent=55 // loop_header_branch
                %252 = sbr.rel (%p250) target = $region63
              $region60: #{hamiltonian_net_forward.1} parent=55 // loop_body
                %v256 = vld [vmem:[%s254] sm:%s247]
                %257 = vst [vmem:[%s255] sm:%s247] %v256
                %v258 = vld [vmem:[%s254 + $0x10] sm:%s247]
                %259 = vst [vmem:[%s255 + $0x8] sm:%s247] %v258
                %v260 = vld [vmem:[%s254 + $0x20] sm:%s247]
                %261 = vst [vmem:[%s255 + $0x10] sm:%s247] %v260
              $region61: #{hamiltonian_net_forward.1} parent=55 // loop_footer
                %s253 = sadd.s32 1, %s249
              $region62: #{hamiltonian_net_forward.1} parent=55 // loop_footer_branch
                %248 = sbr.rel target = $region58
              $region63: #{hamiltonian_net_forward.1} parent=55 // loop_exit
                _
            $region56: #{hamiltonian_net_forward.1} parent=47 // pred_fallthru
              _
          $region48: #{hamiltonian_net_forward.1} parent=43 // pred_fallthru
            _
          %280 = vnop
        $region44: #{hamiltonian_net_forward.1} parent=39 // pred_fallthru
          _
      $region40: #{hamiltonian_net_forward.1} parent=5 // pred_fallthru
        _
      %p281 = scmp.le.s32.totalorder 1, %s16
      %p282 = scmp.lt.s32.totalorder %s16, 3
      %p283 = pnand %p281, %p282
      %p284 = pneg %p283
      // Predicated region
      $region79: #{hamiltonian_net_forward.1} parent=5 // pred_check
        _
      $region80: #{hamiltonian_net_forward.1} parent=5 // pred_check_branch
        %286 = sbr.rel (%p283) target = $region82
      $region81: #{hamiltonian_net_forward.1} parent=5 // pred_region
        %s287 = ssub.s32 %s16, 1
        %s288 = sand.u32 %s29, 1
        %s289 = sand.u32 %s29, 1
        %s290 = smul.addr %s289, 24
        %s291 = scalar_lea.vmem [#allocation2], %s290
        // Predicated region
        $region83: #{hamiltonian_net_forward.1} parent=81 // pred_check
          %p292 = pneg %p42
        $region84: #{hamiltonian_net_forward.1} parent=81 // pred_check_branch
          %294 = sbr.rel (%p292) target = $region86
        $region85: #{hamiltonian_net_forward.1} parent=81 // pred_region
          _
        $region86: #{hamiltonian_net_forward.1} parent=81 // pred_fallthru
          _
        %s295 = sand.u32 %s29, 1
        %s296 = sand.u32 %s29, 1
        %s297 = smul.addr %s296, 24
        %s298 = scalar_lea.vmem [#allocation2], %s297
        %p299 = pneg %p42
        %p300 = pneg %p39
        %p301 = pneg %p63
        %p302 = pneg %p60
        %p303 = pneg %p84
        %p304 = pneg %p81
        %p305 = pneg %p105
        %p306 = pneg %p102
        %p307 = pneg %p126
        %p308 = pneg %p123
        %p309 = pneg %p147
        %p310 = pneg %p144
        %p311 = pneg %p168
        %p312 = pneg %p165
        %p313 = pneg %p194
        %p314 = pneg %p191
        %s315 = sand.u32 %s181, 1
        %s316 = scalar_lea.sflag [#allocation4], %s315
        %s317 = sand.u32 %s181, 1
        %s318 = smul.addr %s317, 8
        %s319 = scalar_lea.vmem [#allocation3], %s318
        %v320 = vld [vmem:[%s291] sm:$0xff]
        %v321 = vld [vmem:[%s291 + $0x8] sm:$0xff]
        %v322 = vld [vmem:[%s291 + $0x10] sm:$0x1]
        %v323 = vld [vmem:[%s291 + $0x11] sm:$0x1]
        %v324 = vld [vmem:[%s6] sm:$0xff]
        %v325 = vld [vmem:[%s6 + $0x8] sm:$0xff]
        %v326 = vld [vmem:[%s6 + $0x10] sm:$0xff]
        %v327 = vld [vmem:[%s6 + $0x18] sm:$0xff]
        %v328 = vsub.f32 %v323, %v322
        %v329 = vadd.f32 %v322, %v323
        %v330 = vmul.f32 %v329, 0.5
        %v331 = vadd.f32 %v320, %v321
        %v332 = vmul.f32 %v331, 0.5
        %v333 = vld [vmem:[%s1] sm:$0xff]
        %v334 = vld [vmem:[%s1 + $0x8] sm:$0xff]
        %v335 = vld [vmem:[%s1 + $0x10] sm:$0xff]
        %v336 = vld [vmem:[%s1 + $0x18] sm:$0xff]
        %338 = vset.pattern.permute.xlu0 0
        %339 = vperm.xlu0 %338, %v324
        %v340 = vpop.permute.xlu0 %339
        %343 = vset.pattern.permute.xlu0 0
        %344 = vperm.xlu0 %343, %v325
        %v345 = vpop.permute.xlu0 %344
        %348 = vset.pattern.permute.xlu0 0
        %349 = vperm.xlu0 %348, %v326
        %v350 = vpop.permute.xlu0 %349
        %353 = vset.pattern.permute.xlu0 0
        %354 = vperm.xlu0 %353, %v327
        %v355 = vpop.permute.xlu0 %354
        %vm357 = vcmask 64512
        %v359 = vsel %vm357, %v333, 0
        %v362 = vsel %vm357, %v334, 0
        %v365 = vsel %vm357, %v335, 0
        %v368 = vsel %vm357, %v336, 0
        %370 = vmatprep.subr.mxu0 0.0
        %371 = vmatpush1.msra.mxu0 0.0
        %372 = vmatprep.subr.mxu0 0.0
        %373 = vmatpush1.msra.mxu0 0.0
        %374 = vmatprep.subr.mxu0 0.0
        %375 = vmatpush1.msra.mxu0 0.0
        %376 = vmatprep.subr.mxu0 0.0
        %377 = vmatpush1.msra.mxu0 0.0
        %378 = vmatprep.subr.mxu0 0.0
        %379 = vmatpush1.msra.mxu0 0.0
        %380 = vmatprep.subr.mxu0 0.0
        %381 = vmatpush1.msra.mxu0 0.0
        %382 = vmatprep.subr.mxu0 0.0
        %383 = vmatpush1.msra.mxu0 0.0
        %384 = vmatprep.subr.mxu0 0.0
        %385 = vmatpush1.msra.mxu0 0.0
        %386 = vmatprep.subr.mxu0 0.0
        %387 = vmatpush1.msra.mxu0 0.0
        %388 = vmatprep.subr.mxu0 0.0
        %389 = vmatpush1.msra.mxu0 0.0
        %390 = vmatprep.subr.mxu0 0.0
        %391 = vmatpush1.msra.mxu0 0.0
        %392 = vmatprep.subr.mxu0 0.0
        %393 = vmatpush1.msra.mxu0 0.0
        %394 = vmatprep.subr.mxu0 0.0
        %395 = vmatpush1.msra.mxu0 0.0
        %396 = vmatprep.subr.mxu0 0.0
        %397 = vmatpush1.msra.mxu0 0.0
        %398 = vmatprep.subr.mxu0 0.0
        %399 = vmatpush1.msra.mxu0 0.0
        %400 = vmatprep.subr.mxu0 0.0
        %401 = vmatpush1.msra.mxu0 %v332
        %402 = vmatprep.subr.mxu0 0.0
        %403 = vmatpush2.msra.mxu0 0.0
        %404 = vmatprep.subr.mxu0 0.0
        %405 = vmatpush2.msra.mxu0 0.0
        %406 = vmatprep.subr.mxu0 0.0
        %407 = vmatpush2.msra.mxu0 0.0
        %408 = vmatprep.subr.mxu0 0.0
        %409 = vmatpush2.msra.mxu0 0.0
        %410 = vmatprep.subr.mxu0 0.0
        %411 = vmatpush2.msra.mxu0 0.0
        %412 = vmatprep.subr.mxu0 0.0
        %413 = vmatpush2.msra.mxu0 0.0
        %414 = vmatprep.subr.mxu0 0.0
        %415 = vmatpush2.msra.mxu0 0.0
        %416 = vmatprep.subr.mxu0 0.0
        %417 = vmatpush2.msra.mxu0 0.0
        %418 = vmatprep.subr.mxu0 0.0
        %419 = vmatpush2.msra.mxu0 0.0
        %420 = vmatprep.subr.mxu0 0.0
        %421 = vmatpush2.msra.mxu0 0.0
        %422 = vmatprep.subr.mxu0 0.0
        %423 = vmatpush2.msra.mxu0 0.0
        %424 = vmatprep.subr.mxu0 0.0
        %425 = vmatpush2.msra.mxu0 0.0
        %426 = vmatprep.subr.mxu0 0.0
        %427 = vmatpush2.msra.mxu0 0.0
        %428 = vmatprep.subr.mxu0 0.0
        %429 = vmatpush2.msra.mxu0 0.0
        %430 = vmatprep.subr.mxu0 0.0
        %431 = vmatpush2.msra.mxu0 0.0
        %432 = vmatprep.subr.mxu0 0.0
        %433 = vmatpush2.msra.mxu0 0.0
        %434 = vmatprep.mubr.f32.mxu0 0.0
        %435 = vmatmul.mubr.f32.gmra.mxu0 %v359
        %v436 = vpop.f32.mrf.mxu0
        %v437 = vadd.f32 %v340, %v436
        %v438 = vpop.f32.mrf.mxu0
        %439 = vmatprep.mubr.f32.mxu0 0.0
        %440 = vmatmul.mubr.f32.gmra.mxu0 %v362
        %v441 = vpop.f32.mrf.mxu0
        %v442 = vadd.f32 %v345, %v441
        %v443 = vpop.f32.mrf.mxu0
        %444 = vmatprep.mubr.f32.mxu0 0.0
        %445 = vmatmul.mubr.f32.gmra.mxu0 %v365
        %v446 = vpop.f32.mrf.mxu0
        %v447 = vadd.f32 %v350, %v446
        %v448 = vpop.f32.mrf.mxu0
        %449 = vmatprep.mubr.f32.mxu0 0.0
        %450 = vmatmul.mubr.f32.gmra.mxu0 %v368
        %v451 = vpop.f32.mrf.mxu0
        %v452 = vadd.f32 %v355, %v451
        %v453 = vpop.f32.mrf.mxu0
        %454 = vdwg.mxu0
        %v455 = vtanh.pop %v437
        %v456 = vtanh.pop %v442
        %v457 = vtanh.pop %v447
        %v458 = vtanh.pop %v452
        %v459 = vld [vmem:[%s2] sm:$0xff]
        %v460 = vld [vmem:[%s2 + $0x8] sm:$0xff]
        %v461 = vld [vmem:[%s2 + $0x10] sm:$0xff]
        %v462 = vld [vmem:[%s2 + $0x18] sm:$0xff]
        %463 = vset.pattern.permute.xlu0 1
        %464 = vperm.xlu0 %463, %v324
        %v465 = vpop.permute.xlu0 %464
        %467 = vset.pattern.permute.xlu0 1
        %468 = vperm.xlu0 %467, %v325
        %v469 = vpop.permute.xlu0 %468
        %471 = vset.pattern.permute.xlu0 1
        %472 = vperm.xlu0 %471, %v326
        %v473 = vpop.permute.xlu0 %472
        %475 = vset.pattern.permute.xlu0 1
        %476 = vperm.xlu0 %475, %v327
        %v477 = vpop.permute.xlu0 %476
        %vm479 = vcmask 261120
        %v481 = vsel %vm479, %v459, 0
        %v484 = vsel %vm479, %v460, 0
        %v487 = vsel %vm479, %v461, 0
        %v490 = vsel %vm479, %v462, 0
        %492 = vmatprep.subr.mxu0 0.0
        %493 = vmatpush1.msra.mxu0 0.0
        %494 = vmatprep.subr.mxu0 0.0
        %495 = vmatpush1.msra.mxu0 0.0
        %496 = vmatprep.subr.mxu0 0.0
        %497 = vmatpush1.msra.mxu0 0.0
        %498 = vmatprep.subr.mxu0 0.0
        %499 = vmatpush1.msra.mxu0 0.0
        %500 = vmatprep.subr.mxu0 0.0
        %501 = vmatpush1.msra.mxu0 0.0
        %502 = vmatprep.subr.mxu0 0.0
        %503 = vmatpush1.msra.mxu0 0.0
        %504 = vmatprep.subr.mxu0 0.0
        %505 = vmatpush1.msra.mxu0 0.0
        %506 = vmatprep.subr.mxu0 0.0
        %507 = vmatpush1.msra.mxu0 0.0
        %508 = vmatprep.subr.mxu0 0.0
        %509 = vmatpush1.msra.mxu0 0.0
        %510 = vmatprep.subr.mxu0 0.0
        %511 = vmatpush1.msra.mxu0 0.0
        %512 = vmatprep.subr.mxu0 0.0
        %513 = vmatpush1.msra.mxu0 0.0
        %514 = vmatprep.subr.mxu0 0.0
        %515 = vmatpush1.msra.mxu0 0.0
        %516 = vmatprep.subr.mxu0 0.0
        %517 = vmatpush1.msra.mxu0 %v458
        %518 = vmatprep.subr.mxu0 0.0
        %519 = vmatpush1.msra.mxu0 %v457
        %520 = vmatprep.subr.mxu0 0.0
        %521 = vmatpush1.msra.mxu0 %v456
        %522 = vmatprep.subr.mxu0 0.0
        %523 = vmatpush1.msra.mxu0 %v455
        %524 = vmatprep.subr.mxu0 0.0
        %525 = vmatpush2.msra.mxu0 0.0
        %526 = vmatprep.subr.mxu0 0.0
        %527 = vmatpush2.msra.mxu0 0.0
        %528 = vmatprep.subr.mxu0 0.0
        %529 = vmatpush2.msra.mxu0 0.0
        %530 = vmatprep.subr.mxu0 0.0
        %531 = vmatpush2.msra.mxu0 0.0
        %532 = vmatprep.subr.mxu0 0.0
        %533 = vmatpush2.msra.mxu0 0.0
        %534 = vmatprep.subr.mxu0 0.0
        %535 = vmatpush2.msra.mxu0 0.0
        %536 = vmatprep.subr.mxu0 0.0
        %537 = vmatpush2.msra.mxu0 0.0
        %538 = vmatprep.subr.mxu0 0.0
        %539 = vmatpush2.msra.mxu0 0.0
        %540 = vmatprep.subr.mxu0 0.0
        %541 = vmatpush2.msra.mxu0 0.0
        %542 = vmatprep.subr.mxu0 0.0
        %543 = vmatpush2.msra.mxu0 0.0
        %544 = vmatprep.subr.mxu0 0.0
        %545 = vmatpush2.msra.mxu0 0.0
        %546 = vmatprep.subr.mxu0 0.0
        %547 = vmatpush2.msra.mxu0 0.0
        %548 = vmatprep.subr.mxu0 0.0
        %549 = vmatpush2.msra.mxu0 0.0
        %550 = vmatprep.subr.mxu0 0.0
        %551 = vmatpush2.msra.mxu0 0.0
        %552 = vmatprep.subr.mxu0 0.0
        %553 = vmatpush2.msra.mxu0 0.0
        %554 = vmatprep.subr.mxu0 0.0
        %555 = vmatpush2.msra.mxu0 0.0
        %556 = vmatprep.mubr.f32.mxu0 0.0
        %557 = vmatmul.mubr.f32.gmra.mxu0 %v481
        %v558 = vpop.f32.mrf.mxu0
        %v559 = vadd.f32 %v465, %v558
        %v560 = vpop.f32.mrf.mxu0
        %561 = vmatprep.mubr.f32.mxu0 0.0
        %562 = vmatmul.mubr.f32.gmra.mxu0 %v484
        %v563 = vpop.f32.mrf.mxu0
        %v564 = vadd.f32 %v469, %v563
        %v565 = vpop.f32.mrf.mxu0
        %566 = vmatprep.mubr.f32.mxu0 0.0
        %567 = vmatmul.mubr.f32.gmra.mxu0 %v487
        %v568 = vpop.f32.mrf.mxu0
        %v569 = vadd.f32 %v473, %v568
        %v570 = vpop.f32.mrf.mxu0
        %571 = vmatprep.mubr.f32.mxu0 0.0
        %572 = vmatmul.mubr.f32.gmra.mxu0 %v490
        %v573 = vpop.f32.mrf.mxu0
        %v574 = vadd.f32 %v477, %v573
        %v575 = vpop.f32.mrf.mxu0
        %576 = vdwg.mxu0
        %v577 = vtanh.pop %v559
        %v578 = vtanh.pop %v564
        %v579 = vtanh.pop %v569
        %v580 = vtanh.pop %v574
        %v581 = vmul.f32 %v577, %v577
        %v582 = vmul.f32 %v578, %v578
        %v583 = vmul.f32 %v579, %v579
        %v584 = vmul.f32 %v580, %v580
        %v585 = vsub.f32 1.0, %v581
        %v586 = vsub.f32 1.0, %v582
        %v587 = vsub.f32 1.0, %v583
        %v588 = vsub.f32 1.0, %v584
        %589 = vset.pattern.permute.xlu0 2
        %590 = vperm.xlu0 %589, %v324
        %v591 = vpop.permute.xlu0 %590
        %593 = vset.pattern.permute.xlu0 2
        %594 = vperm.xlu0 %593, %v325
        %v595 = vpop.permute.xlu0 %594
        %597 = vset.pattern.permute.xlu0 2
        %598 = vperm.xlu0 %597, %v326
        %v599 = vpop.permute.xlu0 %598
        %601 = vset.pattern.permute.xlu0 2
        %602 = vperm.xlu0 %601, %v327
        %v603 = vpop.permute.xlu0 %602
        %v605 = vmul.f32 %v591, %v585
        %v606 = vmul.f32 %v595, %v586
        %v607 = vmul.f32 %v599, %v587
        %v608 = vmul.f32 %v603, %v588
        %v609 = vld [vmem:[%s3] sm:$0xff]
        %v610 = vld [vmem:[%s3 + $0x8] sm:$0xff]
        %v611 = vld [vmem:[%s3 + $0x10] sm:$0xff]
        %v612 = vld [vmem:[%s3 + $0x18] sm:$0xff]
        %v614 = vsel %vm479, %v609, 0
        %v617 = vsel %vm479, %v610, 0
        %v620 = vsel %vm479, %v611, 0
        %v623 = vsel %vm479, %v612, 0
        %625 = vmatprep.subr.mxu0 0.0
        %626 = vmatpush1.msra.mxu0 0.0
        %627 = vmatprep.subr.mxu0 0.0
        %628 = vmatpush1.msra.mxu0 0.0
        %629 = vmatprep.subr.mxu0 0.0
        %630 = vmatpush1.msra.mxu0 0.0
        %631 = vmatprep.subr.mxu0 0.0
        %632 = vmatpush1.msra.mxu0 0.0
        %633 = vmatprep.subr.mxu0 0.0
        %634 = vmatpush1.msra.mxu0 0.0
        %635 = vmatprep.subr.mxu0 0.0
        %636 = vmatpush1.msra.mxu0 0.0
        %637 = vmatprep.subr.mxu0 0.0
        %638 = vmatpush1.msra.mxu0 0.0
        %639 = vmatprep.subr.mxu0 0.0
        %640 = vmatpush1.msra.mxu0 0.0
        %641 = vmatprep.subr.mxu0 0.0
        %642 = vmatpush1.msra.mxu0 0.0
        %643 = vmatprep.subr.mxu0 0.0
        %644 = vmatpush1.msra.mxu0 0.0
        %645 = vmatprep.subr.mxu0 0.0
        %646 = vmatpush1.msra.mxu0 0.0
        %647 = vmatprep.subr.mxu0 0.0
        %648 = vmatpush1.msra.mxu0 0.0
        %649 = vmatprep.subr.mxu0 0.0
        %650 = vmatpush1.msra.mxu0 %v608
        %651 = vmatprep.subr.mxu0 0.0
        %652 = vmatpush1.msra.mxu0 %v607
        %653 = vmatprep.subr.mxu0 0.0
        %654 = vmatpush1.msra.mxu0 %v606
        %655 = vmatprep.subr.mxu0 0.0
        %656 = vmatpush1.msra.mxu0 %v605
        %657 = vmatprep.subr.mxu0 0.0
        %658 = vmatpush2.msra.mxu0 0.0
        %659 = vmatprep.subr.mxu0 0.0
        %660 = vmatpush2.msra.mxu0 0.0
        %661 = vmatprep.subr.mxu0 0.0
        %662 = vmatpush2.msra.mxu0 0.0
        %663 = vmatprep.subr.mxu0 0.0
        %664 = vmatpush2.msra.mxu0 0.0
        %665 = vmatprep.subr.mxu0 0.0
        %666 = vmatpush2.msra.mxu0 0.0
        %667 = vmatprep.subr.mxu0 0.0
        %668 = vmatpush2.msra.mxu0 0.0
        %669 = vmatprep.subr.mxu0 0.0
        %670 = vmatpush2.msra.mxu0 0.0
        %671 = vmatprep.subr.mxu0 0.0
        %672 = vmatpush2.msra.mxu0 0.0
        %673 = vmatprep.subr.mxu0 0.0
        %674 = vmatpush2.msra.mxu0 0.0
        %675 = vmatprep.subr.mxu0 0.0
        %676 = vmatpush2.msra.mxu0 0.0
        %677 = vmatprep.subr.mxu0 0.0
        %678 = vmatpush2.msra.mxu0 0.0
        %679 = vmatprep.subr.mxu0 0.0
        %680 = vmatpush2.msra.mxu0 0.0
        %681 = vmatprep.subr.mxu0 0.0
        %682 = vmatpush2.msra.mxu0 0.0
        %683 = vmatprep.subr.mxu0 0.0
        %684 = vmatpush2.msra.mxu0 0.0
        %685 = vmatprep.subr.mxu0 0.0
        %686 = vmatpush2.msra.mxu0 0.0
        %687 = vmatprep.subr.mxu0 0.0
        %688 = vmatpush2.msra.mxu0 0.0
        %689 = vmatprep.mubr.f32.mxu0 0.0
        %690 = vmatmul.mubr.f32.gmra.mxu0 %v614
        %v691 = vpop.f32.mrf.mxu0
        %v692 = vadd.f32 0.0, %v691
        %v693 = vpop.f32.mrf.mxu0
        %694 = vmatprep.mubr.f32.mxu0 0.0
        %695 = vmatmul.mubr.f32.gmra.mxu0 %v617
        %v696 = vpop.f32.mrf.mxu0
        %v697 = vadd.f32 0.0, %v696
        %v698 = vpop.f32.mrf.mxu0
        %699 = vmatprep.mubr.f32.mxu0 0.0
        %700 = vmatmul.mubr.f32.gmra.mxu0 %v620
        %v701 = vpop.f32.mrf.mxu0
        %v702 = vadd.f32 0.0, %v701
        %v703 = vpop.f32.mrf.mxu0
        %704 = vmatprep.mubr.f32.mxu0 0.0
        %705 = vmatmul.mubr.f32.gmra.mxu0 %v623
        %v706 = vpop.f32.mrf.mxu0
        %v707 = vadd.f32 0.0, %v706
        %v708 = vpop.f32.mrf.mxu0
        %709 = vdwg.mxu0
        %v710 = vmul.f32 %v455, %v455
        %v711 = vmul.f32 %v456, %v456
        %v712 = vmul.f32 %v457, %v457
        %v713 = vmul.f32 %v458, %v458
        %v714 = vsub.f32 1.0, %v710
        %v715 = vsub.f32 1.0, %v711
        %v716 = vsub.f32 1.0, %v712
        %v717 = vsub.f32 1.0, %v713
        %v718 = vmul.f32 %v692, %v714
        %v719 = vmul.f32 %v697, %v715
        %v720 = vmul.f32 %v702, %v716
        %v721 = vmul.f32 %v707, %v717
        %v722 = vld [vmem:[%s4] sm:$0xff]
        %723 = vset.pattern.permute.xlu0 4
        %724 = vperm.xlu0 %723, %v324
        %v725 = vpop.permute.xlu0 %724
        %727 = vset.pattern.permute.xlu0 4
        %728 = vperm.xlu0 %727, %v325
        %v729 = vpop.permute.xlu0 %728
        %731 = vset.pattern.permute.xlu0 4
        %732 = vperm.xlu0 %731, %v326
        %v733 = vpop.permute.xlu0 %732
        %735 = vset.pattern.permute.xlu0 4
        %736 = vperm.xlu0 %735, %v327
        %v737 = vpop.permute.xlu0 %736
        %v739 = vlaneseq
        %v740 = vshrl.u32 %v739, 7
        %v741 = vsub.s32 0, %v740
        %v742 = vrot.slane %v330, %v741
        %v743 = vmul.f32 %v725, %v742
        %v744 = vmul.f32 %v729, %v742
        %v745 = vmul.f32 %v733, %v742
        %v746 = vmul.f32 %v737, %v742
        %747 = vset.pattern.permute.xlu0 3
        %748 = vperm.xlu0 %747, %v324
        %v749 = vpop.permute.xlu0 %748
        %751 = vset.pattern.permute.xlu0 3
        %752 = vperm.xlu0 %751, %v325
        %v753 = vpop.permute.xlu0 %752
        %755 = vset.pattern.permute.xlu0 3
        %756 = vperm.xlu0 %755, %v326
        %v757 = vpop.permute.xlu0 %756
        %759 = vset.pattern.permute.xlu0 3
        %760 = vperm.xlu0 %759, %v327
        %v761 = vpop.permute.xlu0 %760
        %v763 = vadd.f32 %v743, %v749
        %v764 = vadd.f32 %v744, %v753
        %v765 = vadd.f32 %v745, %v757
        %v766 = vadd.f32 %v746, %v761
        %v767 = vtanh.pop %v763
        %v768 = vtanh.pop %v764
        %v769 = vtanh.pop %v765
        %v770 = vtanh.pop %v766
        %v771 = vld [vmem:[%s5] sm:$0xff]
        %v773 = vsel %vm479, %v771, 0
        %775 = vmatprep.subr.mxu0 0.0
        %776 = vmatpush1.msra.mxu0 0.0
        %777 = vmatprep.subr.mxu0 0.0
        %778 = vmatpush1.msra.mxu0 0.0
        %779 = vmatprep.subr.mxu0 0.0
        %780 = vmatpush1.msra.mxu0 0.0
        %781 = vmatprep.subr.mxu0 0.0
        %782 = vmatpush1.msra.mxu0 0.0
        %783 = vmatprep.subr.mxu0 0.0
        %784 = vmatpush1.msra.mxu0 0.0
        %785 = vmatprep.subr.mxu0 0.0
        %786 = vmatpush1.msra.mxu0 0.0
        %787 = vmatprep.subr.mxu0 0.0
        %788 = vmatpush1.msra.mxu0 0.0
        %789 = vmatprep.subr.mxu0 0.0
        %790 = vmatpush1.msra.mxu0 0.0
        %791 = vmatprep.subr.mxu0 0.0
        %792 = vmatpush1.msra.mxu0 0.0
        %793 = vmatprep.subr.mxu0 0.0
        %794 = vmatpush1.msra.mxu0 0.0
        %795 = vmatprep.subr.mxu0 0.0
        %796 = vmatpush1.msra.mxu0 0.0
        %797 = vmatprep.subr.mxu0 0.0
        %798 = vmatpush1.msra.mxu0 0.0
        %799 = vmatprep.subr.mxu0 0.0
        %800 = vmatpush1.msra.mxu0 %v770
        %801 = vmatprep.subr.mxu0 0.0
        %802 = vmatpush1.msra.mxu0 %v769
        %803 = vmatprep.subr.mxu0 0.0
        %804 = vmatpush1.msra.mxu0 %v768
        %805 = vmatprep.subr.mxu0 0.0
        %806 = vmatpush1.msra.mxu0 %v767
        %807 = vmatprep.subr.mxu0 0.0
        %808 = vmatpush2.msra.mxu0 0.0
        %809 = vmatprep.subr.mxu0 0.0
        %810 = vmatpush2.msra.mxu0 0.0
        %811 = vmatprep.subr.mxu0 0.0
        %812 = vmatpush2.msra.mxu0 0.0
        %813 = vmatprep.subr.mxu0 0.0
        %814 = vmatpush2.msra.mxu0 0.0
        %815 = vmatprep.subr.mxu0 0.0
        %816 = vmatpush2.msra.mxu0 0.0
        %817 = vmatprep.subr.mxu0 0.0
        %818 = vmatpush2.msra.mxu0 0.0
        %819 = vmatprep.subr.mxu0 0.0
        %820 = vmatpush2.msra.mxu0 0.0
        %821 = vmatprep.subr.mxu0 0.0
        %822 = vmatpush2.msra.mxu0 0.0
        %823 = vmatprep.subr.mxu0 0.0
        %824 = vmatpush2.msra.mxu0 0.0
        %825 = vmatprep.subr.mxu0 0.0
        %826 = vmatpush2.msra.mxu0 0.0
        %827 = vmatprep.subr.mxu0 0.0
        %828 = vmatpush2.msra.mxu0 0.0
        %829 = vmatprep.subr.mxu0 0.0
        %830 = vmatpush2.msra.mxu0 0.0
        %831 = vmatprep.subr.mxu0 0.0
        %832 = vmatpush2.msra.mxu0 0.0
        %833 = vmatprep.subr.mxu0 0.0
        %834 = vmatpush2.msra.mxu0 0.0
        %835 = vmatprep.subr.mxu0 0.0
        %836 = vmatpush2.msra.mxu0 0.0
        %837 = vmatprep.subr.mxu0 0.0
        %838 = vmatpush2.msra.mxu0 0.0
        %839 = vmatprep.mubr.f32.mxu0 0.0
        %840 = vmatmul.mubr.f32.gmra.mxu0 %v773
        %v841 = vpop.f32.mrf.mxu0
        %v842 = vadd.f32 0.0, %v841
        %v843 = vpop.f32.mrf.mxu0
        %844 = vdwg.mxu0
        %v846 = vsel %vm479, %v722, 0
        %848 = vmatprep.subr.mxu0 0.0
        %849 = vmatpush1.msra.mxu0 0.0
        %850 = vmatprep.subr.mxu0 0.0
        %851 = vmatpush1.msra.mxu0 0.0
        %852 = vmatprep.subr.mxu0 0.0
        %853 = vmatpush1.msra.mxu0 0.0
        %854 = vmatprep.subr.mxu0 0.0
        %855 = vmatpush1.msra.mxu0 0.0
        %856 = vmatprep.subr.mxu0 0.0
        %857 = vmatpush1.msra.mxu0 0.0
        %858 = vmatprep.subr.mxu0 0.0
        %859 = vmatpush1.msra.mxu0 0.0
        %860 = vmatprep.subr.mxu0 0.0
        %861 = vmatpush1.msra.mxu0 0.0
        %862 = vmatprep.subr.mxu0 0.0
        %863 = vmatpush1.msra.mxu0 0.0
        %864 = vmatprep.subr.mxu0 0.0
        %865 = vmatpush1.msra.mxu0 0.0
        %866 = vmatprep.subr.mxu0 0.0
        %867 = vmatpush1.msra.mxu0 0.0
        %868 = vmatprep.subr.mxu0 0.0
        %869 = vmatpush1.msra.mxu0 0.0
        %870 = vmatprep.subr.mxu0 0.0
        %871 = vmatpush1.msra.mxu0 0.0
        %872 = vmatprep.subr.mxu0 0.0
        %873 = vmatpush1.msra.mxu0 %v721
        %874 = vmatprep.subr.mxu0 0.0
        %875 = vmatpush1.msra.mxu0 %v720
        %876 = vmatprep.subr.mxu0 0.0
        %877 = vmatpush1.msra.mxu0 %v719
        %878 = vmatprep.subr.mxu0 0.0
        %879 = vmatpush1.msra.mxu0 %v718
        %880 = vmatprep.subr.mxu0 0.0
        %881 = vmatpush2.msra.mxu0 0.0
        %882 = vmatprep.subr.mxu0 0.0
        %883 = vmatpush2.msra.mxu0 0.0
        %884 = vmatprep.subr.mxu0 0.0
        %885 = vmatpush2.msra.mxu0 0.0
        %886 = vmatprep.subr.mxu0 0.0
        %887 = vmatpush2.msra.mxu0 0.0
        %888 = vmatprep.subr.mxu0 0.0
        %889 = vmatpush2.msra.mxu0 0.0
        %890 = vmatprep.subr.mxu0 0.0
        %891 = vmatpush2.msra.mxu0 0.0
        %892 = vmatprep.subr.mxu0 0.0
        %893 = vmatpush2.msra.mxu0 0.0
        %894 = vmatprep.subr.mxu0 0.0
        %895 = vmatpush2.msra.mxu0 0.0
        %896 = vmatprep.subr.mxu0 0.0
        %897 = vmatpush2.msra.mxu0 0.0
        %898 = vmatprep.subr.mxu0 0.0
        %899 = vmatpush2.msra.mxu0 0.0
        %900 = vmatprep.subr.mxu0 0.0
        %901 = vmatpush2.msra.mxu0 0.0
        %902 = vmatprep.subr.mxu0 0.0
        %903 = vmatpush2.msra.mxu0 0.0
        %904 = vmatprep.subr.mxu0 0.0
        %905 = vmatpush2.msra.mxu0 0.0
        %906 = vmatprep.subr.mxu0 0.0
        %907 = vmatpush2.msra.mxu0 0.0
        %908 = vmatprep.subr.mxu0 0.0
        %909 = vmatpush2.msra.mxu0 0.0
        %910 = vmatprep.subr.mxu0 0.0
        %911 = vmatpush2.msra.mxu0 0.0
        %912 = vmatprep.mubr.f32.mxu0 0.0
        %913 = vmatmul.mubr.f32.gmra.mxu0 %v846
        %v914 = vpop.f32.mrf.mxu0
        %v915 = vadd.f32 %v842, %v914
        %v916 = vpop.f32.mrf.mxu0
        %917 = vdwg.mxu0
        %918 = vset.pattern.permute.xlu0 5
        %919 = vperm.xlu0 %918, %v324
        %v920 = vpop.permute.xlu0 %919
        %v922 = vadd.f32 %v915, %v920
        %v923 = vlaneseq
        %v924 = vshrl.u32 %v923, 7
        %v925 = vsub.s32 0, %v924
        %v926 = vrot.slane %v328, %v925
        %v927 = vmul.f32 %v926, %v922
        %v928 = vadd.f32 %v320, %v927
        %929 = vst [vmem:[%s319] sm:$0xff] %v928
        %s930 = sand.u32 %s181, 1
        %s931 = scalar_lea.sflag [#allocation4], %s930
        %s932 = sand.u32 %s181, 1
        %s933 = smul.addr %s932, 8
        %s934 = scalar_lea.vmem [#allocation3], %s933
        // Predicated region
        $region87: #{hamiltonian_net_forward.1} parent=81 // pred_check
          %p935 = pneg %p191
        $region88: #{hamiltonian_net_forward.1} parent=81 // pred_check_branch
          %937 = sbr.rel (%p935) target = $region90
        $region89: #{hamiltonian_net_forward.1} parent=81 // pred_region
          %s939 = ssub.s32 128, 128
          %940 = vsyncadd %s931, %s939
          %s941 = smul.addr %s21, 128
          %s942 = scalar_lea.hbm %s7, %s941
          %s944 = sshll.u32 %s934, 4
          %s945 = int_to_ptr.vmem [resolvable:$true] %s944
          %947 = dma.vmem_to_hbm [thread:$0]  %s945, 128, %s942, %s931
        $region90: #{hamiltonian_net_forward.1} parent=81 // pred_fallthru
          _
      $region82: #{hamiltonian_net_forward.1} parent=5 // pred_fallthru
        _
      %p948 = scmp.le.s32.totalorder 2, %s16
      // Predicated region
      $region91: #{hamiltonian_net_forward.1} parent=5 // pred_check
        %p949 = pneg %p948
      $region92: #{hamiltonian_net_forward.1} parent=5 // pred_check_branch
        %951 = sbr.rel (%p949) target = $region94
      $region93: #{hamiltonian_net_forward.1} parent=5 // pred_region
        %s952 = ssub.s32 %s16, 2
        // Predicated region
        $region95: #{hamiltonian_net_forward.1} parent=93 // pred_check
          %p953 = pneg %p197
        $region96: #{hamiltonian_net_forward.1} parent=93 // pred_check_branch
          %955 = sbr.rel (%p953) target = $region98
        $region97: #{hamiltonian_net_forward.1} parent=93 // pred_region
          %s956 = sand.u32 %s182, 1
          %s957 = scalar_lea.sflag [#allocation4], %s956
          %s958 = sand.u32 %s182, 1
          %s959 = smul.addr %s958, 8
          %s960 = scalar_lea.vmem [#allocation3], %s959
          %961 = dma.done %s957, 128
        $region98: #{hamiltonian_net_forward.1} parent=93 // pred_fallthru
          _
      $region94: #{hamiltonian_net_forward.1} parent=5 // pred_fallthru
        _
    $region6: #{hamiltonian_net_forward.1} parent=1 // loop_footer
      %s20 = sadd.s32 1, %s16
    $region7: #{hamiltonian_net_forward.1} parent=1 // loop_footer_branch
      %15 = sbr.rel target = $region3
    $region8: #{hamiltonian_net_forward.1} parent=1 // loop_exit
      _
    %962 = vsyncpa [#allocation4], 1
    %s963 = scalar_lea.sflag [#allocation4], 1
    %964 = vsyncpa %s963, 1

</llo_original>
